<compile_context>
chip_gen: v7x
topology: tpu7x:2x2x1
jax: 0.10.0
libtpu: 0.0.40
codegen_flags: <defaults>
</compile_context>

<pallas_src>
import math

import jax
import jax.numpy as jnp
from jax.experimental import pallas as pl
from jax.experimental.pallas import tpu as pltpu


def _round_up(v, m):
    return (v + m - 1) // m * m


def _mlp_kernel(x_ref, w1_ref, b1_ref, w2_ref, b2_ref, o_ref, acc_ref):
    k = pl.program_id(2)
    nk = pl.num_programs(2)

    @pl.when(k == 0)
    def _():
        acc_ref[...] = jnp.zeros_like(acc_ref)

    # fc1 chunk: [TM, in] @ [in, TK] + b1[k-chunk]  -> ReLU    (f32 accumulate)
    h = jnp.dot(x_ref[...], w1_ref[...], preferred_element_type=jnp.float32)
    h = jnp.maximum(h + b1_ref[...], 0.0)          # b1_ref is [1, TK], f32
    # dropout: identity (eval mode)
    # fc2 partial: acc += h_k @ w2[k-chunk, j-chunk]  (bf16 in, f32 accumulate)
    acc_ref[...] += jnp.dot(h.astype(w2_ref.dtype), w2_ref[...],
                            preferred_element_type=jnp.float32)

    @pl.when(k == nk - 1)
    def _():
        # fc2 bias added exactly once, in the finalize step.
        o_ref[...] = (acc_ref[...] + b2_ref[...]).astype(o_ref.dtype)


def _pick_vmem_limit():
    """Generation-aware VMEM budget (conservative default for v7x/unknown)."""
    try:
        kind = jax.devices()[0].device_kind.lower()
    except Exception:  # pragma: no cover - defensive
        kind = ""
    if "v5" in kind or "v6" in kind:
        return 96 * 1024 * 1024     # 128 MiB physical -> use most of it
    return 48 * 1024 * 1024         # v7x: 64 MiB physical per TC -> headroom


def _tile_vmem_bytes(tm, tk, tn, in_size, cbytes, obytes):
    """Estimate VMEM for double-buffered streamed tiles + f32 accumulator."""
    dbl = 2  # Pallas double-buffers each BlockSpec-streamed operand
    b = dbl * tm * in_size * cbytes          # x tile (bf16)
    b += dbl * in_size * tk * cbytes         # w1 tile (bf16)
    b += dbl * tk * 4                        # b1 tile (f32)
    b += dbl * tk * tn * cbytes              # w2 tile (bf16)
    b += dbl * tn * 4                        # b2 tile (f32)
    b += dbl * tm * tn * obytes              # out tile
    b += tm * tn * 4                         # f32 accumulator scratch
    return b


def mlp_forward(x, w1, b1, w2, b2, *, compute_dtype=jnp.bfloat16,
                tm_max=512, tn_max=512, tk_max=2048, vmem_limit_bytes=None):
    """x: [batch, seq, in_size] -> [batch, seq, out_size]."""
    batch, seq, in_size = x.shape
    mid_size = w1.shape[1]
    out_size = w2.shape[1]
    M = batch * seq

    out_dtype = x.dtype
    cbytes = jnp.dtype(compute_dtype).itemsize
    obytes = jnp.dtype(out_dtype).itemsize

    if vmem_limit_bytes is None:
        vmem_limit_bytes = _pick_vmem_limit()
    budget = int(0.70 * vmem_limit_bytes)

    # ---- tile selection -----------------------------------------------------
    tm = min(tm_max, _round_up(M, 8))
    # Keep >= 2 M tiles when possible so the "parallel" axis can shard across
    # the two TensorCores of a v7x chip (harmless on single-TC v5e/v6e).
    if _round_up(M, tm) == tm and tm >= 16:
        tm = _round_up(tm // 2, 8)

    # Lane-dense output (multiple of 128) and mid chunk; start with the full
    # (padded) extent so the k reduction collapses and weights stream once.
    tn = min(tn_max, _round_up(out_size, 128))
    tk = min(tk_max, _round_up(mid_size, 128))

    # Shrink tk, then tn, then tm until the working set fits the VMEM budget.
    while _tile_vmem_bytes(tm, tk, tn, in_size, cbytes, obytes) > budget and tk > 256:
        tk = _round_up(tk // 2, 128)
    while _tile_vmem_bytes(tm, tk, tn, in_size, cbytes, obytes) > budget and tn > 256:
        tn = _round_up(tn // 2, 128)
    while _tile_vmem_bytes(tm, tk, tn, in_size, cbytes, obytes) > budget and tm > 64:
        tm = _round_up(tm // 2, 8)

    m_pad = _round_up(M, tm)
    mid_pad = _round_up(mid_size, tk)
    out_pad = _round_up(out_size, tn)

    # ---- padding (zero-padding is exact for this MLP) -----------------------
    x2d = x.reshape(M, in_size)
    if m_pad != M:
        x2d = jnp.pad(x2d, ((0, m_pad - M), (0, 0)))
    if mid_pad != mid_size:
        # Padded hidden units are ReLU(0 + 0) = 0 and multiply zero rows of
        # w2, so the result is exact.
        w1 = jnp.pad(w1, ((0, 0), (0, mid_pad - mid_size)))
        b1 = jnp.pad(b1, ((0, mid_pad - mid_size),))
        w2 = jnp.pad(w2, ((0, mid_pad - mid_size), (0, 0)))
    if out_pad != out_size:
        # Lane-dense output: padded columns are sliced off afterwards.
        w2 = jnp.pad(w2, ((0, 0), (0, out_pad - out_size)))
        b2 = jnp.pad(b2, ((0, out_pad - out_size),))

    # bf16 inputs/weights for the MXU; biases & accumulation stay f32.
    x2d = x2d.astype(compute_dtype)
    w1 = w1.astype(compute_dtype)
    w2 = w2.astype(compute_dtype)
    b1_2d = b1.astype(jnp.float32).reshape(1, mid_pad)
    b2_2d = b2.astype(jnp.float32).reshape(1, out_pad)

    grid = (m_pad // tm, out_pad // tn, mid_pad // tk)

    flops = 2 * M * mid_size * (in_size + out_size)
    bytes_accessed = (x2d.size * cbytes + w1.size * cbytes + w2.size * cbytes
                      + b1_2d.size * 4 + b2_2d.size * 4
                      + m_pad * out_pad * obytes)

    out2d = pl.pallas_call(
        _mlp_kernel,
        out_shape=jax.ShapeDtypeStruct((m_pad, out_pad), out_dtype),
        grid_spec=pltpu.PrefetchScalarGridSpec(
            num_scalar_prefetch=0,
            grid=grid,
            in_specs=[
                # x tile: streamed over M, resident across the n/k axes.
                pl.BlockSpec((tm, in_size), lambda i, j, k: (i, 0)),
                # fc1 weight / bias chunks streamed along the mid dimension.
                pl.BlockSpec((in_size, tk), lambda i, j, k: (0, k)),
                pl.BlockSpec((1, tk), lambda i, j, k: (0, k)),
                # fc2 weight chunk: (mid chunk, out chunk).
                pl.BlockSpec((tk, tn), lambda i, j, k: (k, j)),
                pl.BlockSpec((1, tn), lambda i, j, k: (0, j)),
            ],
            out_specs=pl.BlockSpec((tm, tn), lambda i, j, k: (i, j)),
            scratch_shapes=[pltpu.VMEM((tm, tn), jnp.float32)],
        ),
        compiler_params=pltpu.CompilerParams(
            dimension_semantics=("parallel", "parallel", "arbitrary"),
            vmem_limit_bytes=vmem_limit_bytes,
        ),
        cost_estimate=pl.CostEstimate(
            flops=flops, transcendentals=0, bytes_accessed=bytes_accessed),
    )(x2d, w1, b1_2d, w2, b2_2d)

    return out2d[:M, :out_size].reshape(batch, seq, out_size)


def init_mlp_params(key, in_size, mid_size, out_size, dtype=jnp.float32):
    """Deterministic init mimicking nn.Linear defaults (kaiming-uniform-ish)."""
    k1, k2, k3, k4 = jax.random.split(key, 4)
    bound1 = 1.0 / math.sqrt(in_size)
    bound2 = 1.0 / math.sqrt(mid_size)
    # stored already transposed: [in, mid] and [mid, out]
    w1 = jax.random.uniform(k1, (in_size, mid_size), dtype, -bound1, bound1)
    b1 = jax.random.uniform(k2, (mid_size,), dtype, -bound1, bound1)
    w2 = jax.random.uniform(k3, (mid_size, out_size), dtype, -bound2, bound2)
    b2 = jax.random.uniform(k4, (out_size,), dtype, -bound2, bound2)
    return w1, b1, w2, b2


def mlp_reference(x, w1, b1, w2, b2):
    h = jnp.maximum(jnp.einsum("bsi,im->bsm", x, w1) + b1, 0.0)
    return jnp.einsum("bsm,mo->bso", h, w2) + b2


if __name__ == "__main__":
    batch, seq = 2, 8
    in_size, mid_size, out_size = 32, 64, 32

    key = jax.random.PRNGKey(0)
    kx, kp = jax.random.split(key)
    x = jax.random.normal(kx, (batch, seq, in_size), jnp.float32)
    w1, b1, w2, b2 = init_mlp_params(kp, in_size, mid_size, out_size)

    out = mlp_forward(x, w1, b1, w2, b2)
    out = jax.block_until_ready(out)

    ref = mlp_reference(x, w1, b1, w2, b2)
    assert out.shape == (batch, seq, out_size)
    assert out.dtype == x.dtype
    # bf16 inputs/weights with f32 accumulation -> mixed-precision tolerance.
    assert jnp.allclose(out, ref, atol=2e-2, rtol=2e-2)

    print("KERNEL_OK")
</pallas_src>

<mosaic_0001>
module attributes {stable_mosaic.version = 11 : i64} {
  func.func @_mlp_kernel(%arg0: i32, %arg1: i32, %arg2: i32, %arg3: memref<8x32xbf16, #tpu.memory_space<vmem>>, %arg4: memref<32x128xbf16, #tpu.memory_space<vmem>>, %arg5: memref<1x128xf32, #tpu.memory_space<vmem>>, %arg6: memref<128x128xbf16, #tpu.memory_space<vmem>>, %arg7: memref<1x128xf32, #tpu.memory_space<vmem>>, %arg8: memref<8x128xf32, #tpu.memory_space<vmem>>, %arg9: memref<8x128xf32, #tpu.memory_space<vmem>>) attributes {dimension_semantics = [#tpu.dimension_semantics<parallel>, #tpu.dimension_semantics<parallel>, #tpu.dimension_semantics<arbitrary>], iteration_bounds = array<i64: 2, 1, 1>, scalar_prefetch = 0 : i64, scratch_operands = 1 : i64, tpu.core_type = #tpu.core_type<tc>, window_params = [{transform_indices = @transform_0, window_bounds = array<i64: 8, 32>}, {transform_indices = @transform_1, window_bounds = array<i64: 32, 128>}, {transform_indices = @transform_2, window_bounds = array<i64: 1, 128>}, {transform_indices = @transform_3, window_bounds = array<i64: 128, 128>}, {transform_indices = @transform_4, window_bounds = array<i64: 1, 128>}, {transform_indices = @transform_5, window_bounds = array<i64: 8, 128>}]} {
    %c0_i32 = arith.constant 0 : i32
    %0 = arith.cmpi eq, %arg2, %c0_i32 : i32
    %1 = arith.extui %0 : i1 to i32
    %c0_i32_0 = arith.constant 0 : i32
    %2 = arith.cmpi ne, %1, %c0_i32_0 : i32
    scf.if %2 {
      %cst_16 = arith.constant 0.000000e+00 : f32
      %20 = vector.broadcast %cst_16 : f32 to vector<8x128xf32>
      %c0_17 = arith.constant 0 : index
      %c0_18 = arith.constant 0 : index
      %21 = vector.load %arg9[%c0_17, %c0_18] : memref<8x128xf32, #tpu.memory_space<vmem>>, vector<8x128xf32>
      tpu.vector_store %arg9[%c0_17, %c0_18], %20 {strides = array<i32>} : memref<8x128xf32, #tpu.memory_space<vmem>>, vector<8x128xf32>,
    } else {
    }
    %c0 = arith.constant 0 : index
    %c0_1 = arith.constant 0 : index
    %3 = vector.load %arg3[%c0, %c0_1] : memref<8x32xbf16, #tpu.memory_space<vmem>>, vector<8x32xbf16>
    %c0_2 = arith.constant 0 : index
    %c0_3 = arith.constant 0 : index
    %4 = vector.load %arg4[%c0_2, %c0_3] : memref<32x128xbf16, #tpu.memory_space<vmem>>, vector<32x128xbf16>
    %cst = arith.constant dense<0.000000e+00> : vector<8x128xf32>
    %5 = tpu.matmul %3, %4, %cst {dimension_numbers = #tpu.dot_dimension_numbers<[1], [0], [0], [1], [0, 0, 1, 1], [], []>} : vector<8x32xbf16>, vector<32x128xbf16>, vector<8x128xf32> -> vector<8x128xf32>
    %c0_4 = arith.constant 0 : index
    %c0_5 = arith.constant 0 : index
    %6 = vector.load %arg5[%c0_4, %c0_5] : memref<1x128xf32, #tpu.memory_space<vmem>>, vector<1x128xf32>
    %7 = vector.broadcast %6 : vector<1x128xf32> to vector<8x128xf32>
    %8 = arith.addf %5, %7 : vector<8x128xf32>
    %cst_6 = arith.constant 0.000000e+00 : f32
    %9 = vector.broadcast %cst_6 : f32 to vector<8x128xf32>
    %10 = arith.maximumf %8, %9 : vector<8x128xf32>
    %c0_7 = arith.constant 0 : index
    %c0_8 = arith.constant 0 : index
    %11 = vector.load %arg9[%c0_7, %c0_8] : memref<8x128xf32, #tpu.memory_space<vmem>>, vector<8x128xf32>
    %12 = arith.truncf %10 : vector<8x128xf32> to vector<8x128xbf16>
    %c0_9 = arith.constant 0 : index
    %c0_10 = arith.constant 0 : index
    %13 = vector.load %arg6[%c0_9, %c0_10] : memref<128x128xbf16, #tpu.memory_space<vmem>>, vector<128x128xbf16>
    %cst_11 = arith.constant dense<0.000000e+00> : vector<8x128xf32>
    %14 = tpu.matmul %12, %13, %cst_11 {dimension_numbers = #tpu.dot_dimension_numbers<[1], [0], [0], [1], [0, 0, 1, 1], [], []>} : vector<8x128xbf16>, vector<128x128xbf16>, vector<8x128xf32> -> vector<8x128xf32>
    %15 = arith.addf %11, %14 : vector<8x128xf32>
    %c0_12 = arith.constant 0 : index
    %c0_13 = arith.constant 0 : index
    %16 = vector.load %arg9[%c0_12, %c0_13] : memref<8x128xf32, #tpu.memory_space<vmem>>, vector<8x128xf32>
    tpu.vector_store %arg9[%c0_12, %c0_13], %15 {strides = array<i32>} : memref<8x128xf32, #tpu.memory_space<vmem>>, vector<8x128xf32>,
    %c0_i32_14 = arith.constant 0 : i32
    %17 = arith.cmpi eq, %arg2, %c0_i32_14 : i32
    %18 = arith.extui %17 : i1 to i32
    %c0_i32_15 = arith.constant 0 : i32
    %19 = arith.cmpi ne, %18, %c0_i32_15 : i32
    scf.if %19 {
      %c0_16 = arith.constant 0 : index
      %c0_17 = arith.constant 0 : index
      %20 = vector.load %arg9[%c0_16, %c0_17] : memref<8x128xf32, #tpu.memory_space<vmem>>, vector<8x128xf32>
      %c0_18 = arith.constant 0 : index
      %c0_19 = arith.constant 0 : index
      %21 = vector.load %arg7[%c0_18, %c0_19] : memref<1x128xf32, #tpu.memory_space<vmem>>, vector<1x128xf32>
      %22 = vector.broadcast %21 : vector<1x128xf32> to vector<8x128xf32>
      %23 = arith.addf %20, %22 : vector<8x128xf32>
      %c0_20 = arith.constant 0 : index
      %c0_21 = arith.constant 0 : index
      %24 = vector.load %arg8[%c0_20, %c0_21] : memref<8x128xf32, #tpu.memory_space<vmem>>, vector<8x128xf32>
      tpu.vector_store %arg8[%c0_20, %c0_21], %23 {strides = array<i32>} : memref<8x128xf32, #tpu.memory_space<vmem>>, vector<8x128xf32>,
    } else {
    }
    return
  }
  func.func @transform_0(%arg0: i32, %arg1: i32, %arg2: i32) -> (i32, i32) {
    %c0_i32 = arith.constant 0 : i32
    %c0_i32_0 = arith.constant 0 : i32
    return %arg0, %c0_i32 : i32, i32
  }
  func.func @transform_1(%arg0: i32, %arg1: i32, %arg2: i32) -> (i32, i32) {
    %c0_i32 = arith.constant 0 : i32
    %c0_i32_0 = arith.constant 0 : i32
    return %c0_i32, %arg2 : i32, i32
  }
  func.func @transform_2(%arg0: i32, %arg1: i32, %arg2: i32) -> (i32, i32) {
    %c0_i32 = arith.constant 0 : i32
    %c0_i32_0 = arith.constant 0 : i32
    return %c0_i32, %arg2 : i32, i32
  }
  func.func @transform_3(%arg0: i32, %arg1: i32, %arg2: i32) -> (i32, i32) {
    %c0_i32 = arith.constant 0 : i32
    return %arg2, %arg1 : i32, i32
  }
  func.func @transform_4(%arg0: i32, %arg1: i32, %arg2: i32) -> (i32, i32) {
    %c0_i32 = arith.constant 0 : i32
    %c0_i32_0 = arith.constant 0 : i32
    return %c0_i32, %arg1 : i32, i32
  }
  func.func @transform_5(%arg0: i32, %arg1: i32, %arg2: i32) -> (i32, i32) {
    %c0_i32 = arith.constant 0 : i32
    return %arg0, %arg1 : i32, i32
  }
}

</mosaic_0001>

<llo_original>
// kernel: tpu_custom_call.1
$region0: #{tpu_custom_call.1}
  #allocation0 [shape = 'u32[]', space=smem, size = 0x4, offset = 0x4, fixed_abs, tag = 'smem constant byte address 0x4 - core index']
  #allocation1 [shape = 'u32[144,128]{1,0:T(1,128)}', space=vmem, size = 0x12000, scoped, tag = 'internal scratch']
  #allocation2 [shape = 'f32[8,128]{1,0:T(8,128)}', space=vmem, size = 0x1000, scoped, tag = 'scratch operand']
  %s0 = inlined_call_operand.hbm [shape: bf16[16,32], index: 0, kind: input, shape index: {}]
  %s1 = inlined_call_operand.hbm [shape: bf16[32,128], index: 1, kind: input, shape index: {}]
  %s2 = inlined_call_operand.vmem [shape: f32[1,128], index: 2, kind: input, shape index: {}]
  %s3 = inlined_call_operand.hbm [shape: bf16[128,128], index: 3, kind: input, shape index: {}]
  %s4 = inlined_call_operand.vmem [shape: f32[1,128], index: 4, kind: input, shape index: {}]
  %s5 = inlined_call_operand.hbm [shape: f32[16,128], index: 5, kind: output, shape index: {}]
  %s6 = sld [smem:[#allocation0]]
  $region73: #{tpu_custom_call.1} parent=0
    _
  %s8 = ssub.s32 1, %s6
  %s9 = scalar_select 0, %s8, %s6
  $region1: #{tpu_custom_call.1} parent=0
    #allocation3 [shape = 'u8[4096]{0}', space=vmem, size = 0x1000, scoped, tag = 'input window, operand 0']
    #allocation4 [shape = 's32[2]{0}', space=sflag, size = 0x8, scoped, tag = 'scoped memory for tpu_custom_call.1']
    #allocation5 [shape = 's32[2]{0}', space=sflag, size = 0x8, scoped, tag = 'scoped memory for tpu_custom_call.1']
    #allocation6 [shape = 'u8[8192]{0}', space=vmem, size = 0x2000, scoped, tag = 'input window, operand 1, single buffered']
    #allocation7 [shape = 's32[1]{0}', space=sflag, size = 0x4, scoped, tag = 'scoped memory for tpu_custom_call.1']
    #allocation8 [shape = 'u8[32768]{0}', space=vmem, size = 0x8000, scoped, tag = 'input window, operand 3, single buffered']
    #allocation9 [shape = 'u8[8192]{0}', space=vmem, size = 0x2000, scoped, tag = 'output window, operand 0']
    %10 = vsyncpa [#allocation4], 0
    %s11 = scalar_lea.sflag [#allocation4], 1
    %12 = vsyncpa %s11, 0
    %13 = vsyncpa [#allocation7], 0
    %14 = vsyncpa [#allocation5], 0
    %s15 = scalar_lea.sflag [#allocation5], 1
    %16 = vsyncpa %s15, 0
    loop: start=0, step=1, limit=4
    $region2: #{tpu_custom_call.1} parent=1 // loop_pre_header
      _
    $region3: #{tpu_custom_call.1} parent=1 // loop_header
      %s18 = sphi 0, %s22
      %p19 = scmp.ge.s32.totalorder %s18, 4
      %s25 = sphi 0, %s44
      %s26 = sphi 0, %s40
      %s27 = sphi 0, %s36
      %s28 = sphi 0, %s25
      %s29 = sphi 0, %s26
      %s30 = sphi 0, %s27
      %s31 = sphi 0, %s28
      %s32 = sphi 0, %s29
      %s33 = sphi 0, %s30
      %s47 = sphi 0, %s49
      %s50 = sphi 0, %s47
      %s51 = sphi 0, %s50
      %s67 = sphi 0, %s51
      %s73 = sphi 0, %s75
      %s76 = sphi 0, %s73
      %s77 = sphi 0, %s76
      %s93 = sphi 0, %s77
      %s99 = sphi 0, %s101
      %s102 = sphi 0, %s99
      %s103 = sphi 0, %s102
      %s119 = sphi 0, %s103
      %s127 = sphi 0, %s129
      %s130 = sphi 0, %s127
      %s131 = sphi 0, %s130
      %s147 = sphi 0, %s131
      %s153 = sphi 0, %s155
      %s156 = sphi 0, %s153
      %s157 = sphi 0, %s156
      %s173 = sphi 0, %s157
      %s181 = sphi 0, %s183
      %s184 = sphi 0, %s181
      %s185 = sphi 0, %s184
      %s201 = sphi 0, %s185
    $region4: #{tpu_custom_call.1} parent=1 // loop_header_branch
      %21 = sbr.rel (%p19) target = $region8
    $region5: #{tpu_custom_call.1} parent=1 // loop_body
      %s23 = ssub.s32 %s18, 1
      %s24 = ssub.s32 %s18, 2
      %s34 = sadd.s32 1, %s27
      %p35 = scmp.ge.s32.totalorder %s34, 1
      %s36 = scalar_select %p35, 0, %s34
      %s37 = sadd.s32 1, %s26
      %s38 = scalar_select %p35, %s37, %s26
      %p39 = scmp.ge.s32.totalorder %s38, 1
      %s40 = scalar_select %p39, 0, %s38
      %s41 = sadd.s32 1, %s25
      %s42 = scalar_select %p39, %s41, %s25
      %p43 = scmp.ge.s32.totalorder %s42, 2
      %s44 = scalar_select %p43, 0, %s42
      %s45 = ssub.s32 %s25, %s44
      %p46 = scmp.eq.s32.totalorder %s45, 0
      %s48 = sadd.s32 %s47, 1
      %s49 = scalar_select %p46, %s47, %s48
      %p52 = pneg %p46
      %p53 = scmp.eq.s32.totalorder %s18, 1
      %p54 = por %p52, %p53
      %p55 = scmp.ne.s32.totalorder %s47, %s50
      %p56 = scmp.eq.s32.totalorder %s18, 0
      %p57 = por %p55, %p56
      %p58 = scmp.ne.s32.totalorder %s47, %s50
      %p59 = scmp.eq.s32.totalorder %s23, 1
      %p60 = por %p58, %p59
      %p61 = scmp.ne.s32.totalorder %s50, %s51
      %p62 = scmp.eq.s32.totalorder %s23, 0
      %p63 = por %p61, %p62
      %p64 = scmp.ne.s32.totalorder %s50, %s51
      %p65 = scmp.eq.s32.totalorder %s24, 1
      %p66 = por %p64, %p65
      %p68 = scmp.ne.s32.totalorder %s51, %s67
      %p69 = scmp.eq.s32.totalorder %s24, 0
      %p70 = por %p68, %p69
      %s71 = ssub.s32 %s27, %s36
      %p72 = scmp.eq.s32.totalorder %s71, 0
      %s74 = sadd.s32 %s73, 1
      %s75 = scalar_select %p72, %s73, %s74
      %p78 = pneg %p72
      %p79 = scmp.eq.s32.totalorder %s18, 1
      %p80 = por %p78, %p79
      %p81 = scmp.ne.s32.totalorder %s73, %s76
      %p82 = scmp.eq.s32.totalorder %s18, 0
      %p83 = por %p81, %p82
      %p84 = scmp.ne.s32.totalorder %s73, %s76
      %p85 = scmp.eq.s32.totalorder %s23, 1
      %p86 = por %p84, %p85
      %p87 = scmp.ne.s32.totalorder %s76, %s77
      %p88 = scmp.eq.s32.totalorder %s23, 0
      %p89 = por %p87, %p88
      %p90 = scmp.ne.s32.totalorder %s76, %s77
      %p91 = scmp.eq.s32.totalorder %s24, 1
      %p92 = por %p90, %p91
      %p94 = scmp.ne.s32.totalorder %s77, %s93
      %p95 = scmp.eq.s32.totalorder %s24, 0
      %p96 = por %p94, %p95
      %s97 = ssub.s32 %s27, %s36
      %p98 = scmp.eq.s32.totalorder %s97, 0
      %s100 = sadd.s32 %s99, 1
      %s101 = scalar_select %p98, %s99, %s100
      %p104 = pneg %p98
      %p105 = scmp.eq.s32.totalorder %s18, 1
      %p106 = por %p104, %p105
      %p107 = scmp.ne.s32.totalorder %s99, %s102
      %p108 = scmp.eq.s32.totalorder %s18, 0
      %p109 = por %p107, %p108
      %p110 = scmp.ne.s32.totalorder %s99, %s102
      %p111 = scmp.eq.s32.totalorder %s23, 1
      %p112 = por %p110, %p111
      %p113 = scmp.ne.s32.totalorder %s102, %s103
      %p114 = scmp.eq.s32.totalorder %s23, 0
      %p115 = por %p113, %p114
      %p116 = scmp.ne.s32.totalorder %s102, %s103
      %p117 = scmp.eq.s32.totalorder %s24, 1
      %p118 = por %p116, %p117
      %p120 = scmp.ne.s32.totalorder %s103, %s119
      %p121 = scmp.eq.s32.totalorder %s24, 0
      %p122 = por %p120, %p121
      %s123 = ssub.s32 %s27, %s36
      %s124 = ssub.s32 %s26, %s40
      %s125 = sor.u32 %s123, %s124
      %p126 = scmp.eq.s32.totalorder %s125, 0
      %s128 = sadd.s32 %s127, 1
      %s129 = scalar_select %p126, %s127, %s128
      %p132 = pneg %p126
      %p133 = scmp.eq.s32.totalorder %s18, 1
      %p134 = por %p132, %p133
      %p135 = scmp.ne.s32.totalorder %s127, %s130
      %p136 = scmp.eq.s32.totalorder %s18, 0
      %p137 = por %p135, %p136
      %p138 = scmp.ne.s32.totalorder %s127, %s130
      %p139 = scmp.eq.s32.totalorder %s23, 1
      %p140 = por %p138, %p139
      %p141 = scmp.ne.s32.totalorder %s130, %s131
      %p142 = scmp.eq.s32.totalorder %s23, 0
      %p143 = por %p141, %p142
      %p144 = scmp.ne.s32.totalorder %s130, %s131
      %p145 = scmp.eq.s32.totalorder %s24, 1
      %p146 = por %p144, %p145
      %p148 = scmp.ne.s32.totalorder %s131, %s147
      %p149 = scmp.eq.s32.totalorder %s24, 0
      %p150 = por %p148, %p149
      %s151 = ssub.s32 %s26, %s40
      %p152 = scmp.eq.s32.totalorder %s151, 0
      %s154 = sadd.s32 %s153, 1
      %s155 = scalar_select %p152, %s153, %s154
      %p158 = pneg %p152
      %p159 = scmp.eq.s32.totalorder %s18, 1
      %p160 = por %p158, %p159
      %p161 = scmp.ne.s32.totalorder %s153, %s156
      %p162 = scmp.eq.s32.totalorder %s18, 0
      %p163 = por %p161, %p162
      %p164 = scmp.ne.s32.totalorder %s153, %s156
      %p165 = scmp.eq.s32.totalorder %s23, 1
      %p166 = por %p164, %p165
      %p167 = scmp.ne.s32.totalorder %s156, %s157
      %p168 = scmp.eq.s32.totalorder %s23, 0
      %p169 = por %p167, %p168
      %p170 = scmp.ne.s32.totalorder %s156, %s157
      %p171 = scmp.eq.s32.totalorder %s24, 1
      %p172 = por %p170, %p171
      %p174 = scmp.ne.s32.totalorder %s157, %s173
      %p175 = scmp.eq.s32.totalorder %s24, 0
      %p176 = por %p174, %p175
      %s177 = ssub.s32 %s25, %s44
      %s178 = ssub.s32 %s26, %s40
      %s179 = sor.u32 %s177, %s178
      %p180 = scmp.eq.s32.totalorder %s179, 0
      %s182 = sadd.s32 %s181, 1
      %s183 = scalar_select %p180, %s181, %s182
      %p186 = pneg %p180
      %p187 = scmp.eq.s32.totalorder %s18, 1
      %p188 = por %p186, %p187
      %p189 = scmp.ne.s32.totalorder %s181, %s184
      %p190 = scmp.eq.s32.totalorder %s18, 0
      %p191 = por %p189, %p190
      %p192 = scmp.ne.s32.totalorder %s181, %s184
      %p193 = scmp.eq.s32.totalorder %s23, 1
      %p194 = por %p192, %p193
      %p195 = scmp.ne.s32.totalorder %s184, %s185
      %p196 = scmp.eq.s32.totalorder %s23, 0
      %p197 = por %p195, %p196
      %p198 = scmp.ne.s32.totalorder %s184, %s185
      %p199 = scmp.eq.s32.totalorder %s24, 1
      %p200 = por %p198, %p199
      %p202 = scmp.ne.s32.totalorder %s185, %s201
      %p203 = scmp.eq.s32.totalorder %s24, 0
      %p204 = por %p202, %p203
      %p205 = scmp.le.s32.totalorder 1, %s18
      %p206 = scmp.lt.s32.totalorder %s18, 3
      %p207 = pnand %p205, %p206
      %p208 = pneg %p207
      // Predicated region
      $region9: #{tpu_custom_call.1} parent=5 // pred_check
        _
      $region10: #{tpu_custom_call.1} parent=5 // pred_check_branch
        %210 = sbr.rel (%p207) target = $region12
      $region11: #{tpu_custom_call.1} parent=5 // pred_region
        %s211 = ssub.s32 %s18, 1
        // Predicated region
        $region13: #{tpu_custom_call.1} parent=11 // pred_check
          %p212 = pneg %p89
        $region14: #{tpu_custom_call.1} parent=11 // pred_check_branch
          %214 = sbr.rel (%p212) target = $region16
        $region15: #{tpu_custom_call.1} parent=11 // pred_region
          %s216 = ssub.s32 256, 256
          %217 = vsyncadd [#allocation7], %s216
          %s218 = smul.addr %s30, 64
          %s219 = scalar_lea.hbm %s1, %s218
          %s220 = sshll.u32 [#allocation6], 4
          %s221 = int_to_ptr.vmem [resolvable:$true] %s220
          %226 = dma.hbm_to_vmem [thread:$0]  %s219, 256, %s221, [#allocation7], 64, 64, 4
        $region16: #{tpu_custom_call.1} parent=11 // pred_fallthru
          _
        // Predicated region
        $region17: #{tpu_custom_call.1} parent=11 // pred_check
          %p227 = pneg %p115
        $region18: #{tpu_custom_call.1} parent=11 // pred_check_branch
          %229 = sbr.rel (%p227) target = $region20
        $region19: #{tpu_custom_call.1} parent=11 // pred_region
          %p230 = scmp.lt.s32.totalorder %s30, 0
          %s231 = scalar_select %p230, %s30, 0
          %s232 = scalar_lea.vmem %s2, %s231
        $region20: #{tpu_custom_call.1} parent=11 // pred_fallthru
          _
        // Predicated region
        $region21: #{tpu_custom_call.1} parent=11 // pred_check
          %p233 = pneg %p143
        $region22: #{tpu_custom_call.1} parent=11 // pred_check_branch
          %235 = sbr.rel (%p233) target = $region24
        $region23: #{tpu_custom_call.1} parent=11 // pred_region
          %s236 = smul.u32 16, %s30
          %s238 = ssub.s32 1024, 1024
          %239 = vsyncadd [#allocation7], %s238
          %s240 = sadd.s32 %s29, %s236
          %s241 = smul.addr %s240, 64
          %s242 = scalar_lea.hbm %s3, %s241
          %s243 = sshll.u32 [#allocation8], 4
          %s244 = int_to_ptr.vmem [resolvable:$true] %s243
          %249 = dma.hbm_to_vmem [thread:$0]  %s242, 1024, %s244, [#allocation7], 64, 64, 4
        $region24: #{tpu_custom_call.1} parent=11 // pred_fallthru
          _
        // Predicated region
        $region25: #{tpu_custom_call.1} parent=11 // pred_check
          %p250 = pneg %p169
        $region26: #{tpu_custom_call.1} parent=11 // pred_check_branch
          %252 = sbr.rel (%p250) target = $region28
        $region27: #{tpu_custom_call.1} parent=11 // pred_region
          %p253 = scmp.lt.s32.totalorder %s29, 0
          %s254 = scalar_select %p253, %s29, 0
          %s255 = scalar_lea.vmem %s4, %s254
        $region28: #{tpu_custom_call.1} parent=11 // pred_fallthru
          _
      $region12: #{tpu_custom_call.1} parent=5 // pred_fallthru
        _
      %p256 = scmp.lt.s32.totalorder %s18, 2
      // Predicated region
      $region29: #{tpu_custom_call.1} parent=5 // pred_check
        %p257 = pneg %p256
      $region30: #{tpu_custom_call.1} parent=5 // pred_check_branch
        %259 = sbr.rel (%p257) target = $region32
      $region31: #{tpu_custom_call.1} parent=5 // pred_region
        // Predicated region
        $region33: #{tpu_custom_call.1} parent=31 // pred_check
          %p260 = pneg %p57
        $region34: #{tpu_custom_call.1} parent=31 // pred_check_branch
          %262 = sbr.rel (%p260) target = $region36
        $region35: #{tpu_custom_call.1} parent=31 // pred_region
          %s263 = sand.u32 %s47, 1
          %s264 = scalar_lea.sflag [#allocation4], %s263
          %s265 = sand.u32 %s47, 1
          %s266 = smul.addr %s265, 4
          %s267 = scalar_lea.vmem [#allocation3], %s266
          %s269 = ssub.s32 64, 64
          %270 = vsyncadd %s264, %s269
          %s271 = smul.addr %s25, 64
          %s272 = scalar_lea.hbm %s0, %s271
          %s274 = sshll.u32 %s267, 4
          %s275 = int_to_ptr.vmem [resolvable:$true] %s274
          %277 = dma.hbm_to_vmem [thread:$0]  %s272, 64, %s275, %s264
        $region36: #{tpu_custom_call.1} parent=31 // pred_fallthru
          _
      $region32: #{tpu_custom_call.1} parent=5 // pred_fallthru
        _
      %p278 = scmp.le.s32.totalorder 1, %s18
      %p279 = scmp.lt.s32.totalorder %s18, 3
      %p280 = pnand %p278, %p279
      %p281 = pneg %p280
      // Predicated region
      $region37: #{tpu_custom_call.1} parent=5 // pred_check
        _
      $region38: #{tpu_custom_call.1} parent=5 // pred_check_branch
        %283 = sbr.rel (%p280) target = $region40
      $region39: #{tpu_custom_call.1} parent=5 // pred_region
        %s284 = ssub.s32 %s18, 1
        %s285 = sand.u32 %s50, 1
        %s286 = scalar_lea.sflag [#allocation4], %s285
        %s287 = sand.u32 %s50, 1
        %s288 = smul.addr %s287, 4
        %s289 = scalar_lea.vmem [#allocation3], %s288
        // Predicated region
        $region41: #{tpu_custom_call.1} parent=39 // pred_check
          %p290 = pneg %p63
        $region42: #{tpu_custom_call.1} parent=39 // pred_check_branch
          %292 = sbr.rel (%p290) target = $region44
        $region43: #{tpu_custom_call.1} parent=39 // pred_region
          %293 = dma.done %s286, 64
        $region44: #{tpu_custom_call.1} parent=39 // pred_fallthru
          _
        // Predicated region
        $region45: #{tpu_custom_call.1} parent=39 // pred_check
          %p294 = pneg %p89
        $region46: #{tpu_custom_call.1} parent=39 // pred_check_branch
          %296 = sbr.rel (%p294) target = $region48
        $region47: #{tpu_custom_call.1} parent=39 // pred_region
          %297 = dma.done [#allocation7], 256
        $region48: #{tpu_custom_call.1} parent=39 // pred_fallthru
          _
        // Predicated region
        $region49: #{tpu_custom_call.1} parent=39 // pred_check
          %p298 = pneg %p143
        $region50: #{tpu_custom_call.1} parent=39 // pred_check_branch
          %300 = sbr.rel (%p298) target = $region52
        $region51: #{tpu_custom_call.1} parent=39 // pred_region
          %301 = dma.done [#allocation7], 1024
        $region52: #{tpu_custom_call.1} parent=39 // pred_fallthru
          _
        %s302 = sand.u32 %s50, 1
        %s303 = scalar_lea.sflag [#allocation4], %s302
        %s304 = sand.u32 %s50, 1
        %s305 = smul.addr %s304, 4
        %s306 = scalar_lea.vmem [#allocation3], %s305
        %p307 = pneg %p63
        %p308 = pneg %p60
        %p309 = pneg %p89
        %p310 = pneg %p86
        %p311 = scmp.lt.s32.totalorder %s30, 0
        %s312 = scalar_select %p311, %s30, 0
        %s313 = scalar_lea.vmem %s2, %s312
        %p314 = pneg %p115
        %p315 = pneg %p112
        %p316 = pneg %p143
        %p317 = pneg %p140
        %p318 = scmp.lt.s32.totalorder %s29, 0
        %s319 = scalar_select %p318, %s29, 0
        %s320 = scalar_lea.vmem %s4, %s319
        %p321 = pneg %p169
        %p322 = pneg %p166
        %p323 = pneg %p197
        %p324 = pneg %p194
        %s325 = sand.u32 %s184, 1
        %s326 = scalar_lea.sflag [#allocation5], %s325
        %s327 = sand.u32 %s184, 1
        %s328 = smul.addr %s327, 8
        %s329 = scalar_lea.vmem [#allocation9], %s328
        %p330 = scmp.lt.s32.totalorder %s30, 0
        %s331 = scalar_select %p330, %s30, 0
        %s332 = scalar_lea.vmem %s2, %s331
        %s333 = smul.u32 16, %s30
        %p334 = scmp.lt.s32.totalorder %s29, 0
        %s335 = scalar_select %p334, %s29, 0
        %s336 = scalar_lea.vmem %s4, %s335
        %p338 = scmp.eq.s32.totalorder %s30, 0
        // Predicated region
        $region53: #{tpu_custom_call.1} parent=39 // pred_check
          %p339 = pneg %p338
        $region54: #{tpu_custom_call.1} parent=39 // pred_check_branch
          %341 = sbr.rel (%p339) target = $region56
        $region55: #{tpu_custom_call.1} parent=39 // pred_region
          %342 = vst [vmem:[#allocation2] sm:$0xff] 0.0
        $region56: #{tpu_custom_call.1} parent=39 // pred_fallthru
          _
        %v343 = vld [vmem:[%s289] sm:$0xf]
        %v344 = vld [vmem:[#allocation6] sm:$0xf]
        %v345 = vld [vmem:[#allocation6 + $0x4] sm:$0xf]
        %v346 = vld [vmem:[#allocation6 + $0x8] sm:$0xf]
        %v347 = vld [vmem:[#allocation6 + $0xc] sm:$0xf]
        %v348 = vld [vmem:[%s332] sm:$0x1]
        %v350 = vlaneseq
        %v351 = vshrl.u32 %v350, 7
        %v352 = vsub.s32 0, %v351
        %v353 = vrot.slane %v348, %v352
        %v359 = vunpack.c.l.b16 %v344
        %v360 = vunpack.c.l.b16 %v345
        %v361 = vunpack.c.l.b16 %v346
        %v362 = vunpack.c.l.b16 %v347
        %v363 = vpack.c.b16 %v360, %v359
        %v364 = vpack.c.b16 %v362, %v361
        %vm367 = vcmask 261120
        %v369 = vsel %vm367, %v343, 0
        %371 = vmatprep.subr.bf16.mxu0 0
        %372 = vmatpush1.bf16.msra.mxu0 %v363
        %373 = vmatprep.subr.bf16.mxu0 0
        %374 = vmatpush1.bf16.msra.mxu0 %v364
        %375 = vmatprep.subr.bf16.mxu0 0
        %376 = vmatpush1.bf16.msra.mxu0 0
        %377 = vmatprep.subr.bf16.mxu0 0
        %378 = vmatpush1.bf16.msra.mxu0 0
        %379 = vmatprep.subr.bf16.mxu0 0
        %380 = vmatpush1.bf16.msra.mxu0 0
        %381 = vmatprep.subr.bf16.mxu0 0
        %382 = vmatpush1.bf16.msra.mxu0 0
        %383 = vmatprep.subr.bf16.mxu0 0
        %384 = vmatpush1.bf16.msra.mxu0 0
        %385 = vmatprep.subr.bf16.mxu0 0
        %386 = vmatpush1.bf16.msra.mxu0 0
        %387 = vmatprep.subr.bf16.mxu0 0
        %388 = vmatpush1.bf16.msra.mxu0 0
        %389 = vmatprep.subr.bf16.mxu0 0
        %390 = vmatpush1.bf16.msra.mxu0 0
        %391 = vmatprep.subr.bf16.mxu0 0
        %392 = vmatpush1.bf16.msra.mxu0 0
        %393 = vmatprep.subr.bf16.mxu0 0
        %394 = vmatpush1.bf16.msra.mxu0 0
        %395 = vmatprep.subr.bf16.mxu0 0
        %396 = vmatpush1.bf16.msra.mxu0 0
        %397 = vmatprep.subr.bf16.mxu0 0
        %398 = vmatpush1.bf16.msra.mxu0 0
        %399 = vmatprep.subr.bf16.mxu0 0
        %400 = vmatpush1.bf16.msra.mxu0 0
        %401 = vmatprep.subr.bf16.mxu0 0
        %402 = vmatpush1.bf16.msra.mxu0 0
        %403 = vmatprep.mubr.bf16.mxu0 0
        %404 = vmatmul.mubr.bf16.gmra.mrb[0].mxu0 %v369
        %v405 = vpop.f32.mrb[0].mxu0
        %v406 = vadd.f32 %v353, %v405
        %v407 = vpop.f32.mrb[0].mxu0
        %v408 = vpop.f32.mrb[0].mxu0
        %v409 = vpop.f32.mrb[0].mxu0
        %410 = vdwg.mxu0
        %v411 = vmax.f32 %v406, 0.0
        %v412 = vld [vmem:[#allocation2] sm:$0xff]
        %v413 = vpack.c.bf16 %v411, %v411
        %v414 = vld [vmem:[#allocation8] sm:$0xf]
        %v415 = vld [vmem:[#allocation8 + $0x4] sm:$0xf]
        %v416 = vld [vmem:[#allocation8 + $0x8] sm:$0xf]
        %v417 = vld [vmem:[#allocation8 + $0xc] sm:$0xf]
        %v418 = vld [vmem:[#allocation8 + $0x10] sm:$0xf]
        %v419 = vld [vmem:[#allocation8 + $0x14] sm:$0xf]
        %v420 = vld [vmem:[#allocation8 + $0x18] sm:$0xf]
        %v421 = vld [vmem:[#allocation8 + $0x1c] sm:$0xf]
        %v422 = vld [vmem:[#allocation8 + $0x20] sm:$0xf]
        %v423 = vld [vmem:[#allocation8 + $0x24] sm:$0xf]
        %v424 = vld [vmem:[#allocation8 + $0x28] sm:$0xf]
        %v425 = vld [vmem:[#allocation8 + $0x2c] sm:$0xf]
        %v426 = vld [vmem:[#allocation8 + $0x30] sm:$0xf]
        %v427 = vld [vmem:[#allocation8 + $0x34] sm:$0xf]
        %v428 = vld [vmem:[#allocation8 + $0x38] sm:$0xf]
        %v429 = vld [vmem:[#allocation8 + $0x3c] sm:$0xf]
        %v446 = vunpack.c.l.b16 %v414
        %v447 = vunpack.c.l.b16 %v415
        %v448 = vunpack.c.l.b16 %v416
        %v449 = vunpack.c.l.b16 %v417
        %v450 = vunpack.c.l.b16 %v418
        %v451 = vunpack.c.l.b16 %v419
        %v452 = vunpack.c.l.b16 %v420
        %v453 = vunpack.c.l.b16 %v421
        %v454 = vunpack.c.l.b16 %v422
        %v455 = vunpack.c.l.b16 %v423
        %v456 = vunpack.c.l.b16 %v424
        %v457 = vunpack.c.l.b16 %v425
        %v458 = vunpack.c.l.b16 %v426
        %v459 = vunpack.c.l.b16 %v427
        %v460 = vunpack.c.l.b16 %v428
        %v461 = vunpack.c.l.b16 %v429
        %v462 = vpack.c.b16 %v447, %v446
        %v463 = vpack.c.b16 %v449, %v448
        %v464 = vpack.c.b16 %v451, %v450
        %v465 = vpack.c.b16 %v453, %v452
        %v466 = vpack.c.b16 %v455, %v454
        %v467 = vpack.c.b16 %v457, %v456
        %v468 = vpack.c.b16 %v459, %v458
        %v469 = vpack.c.b16 %v461, %v460
        %478 = vmatprep.subr.bf16.mxu0 0
        %479 = vmatpush1.bf16.msra.mxu0 %v462
        %480 = vmatprep.subr.bf16.mxu0 0
        %481 = vmatpush1.bf16.msra.mxu0 %v463
        %482 = vmatprep.subr.bf16.mxu0 0
        %483 = vmatpush1.bf16.msra.mxu0 %v464
        %484 = vmatprep.subr.bf16.mxu0 0
        %485 = vmatpush1.bf16.msra.mxu0 %v465
        %486 = vmatprep.subr.bf16.mxu0 0
        %487 = vmatpush1.bf16.msra.mxu0 %v466
        %488 = vmatprep.subr.bf16.mxu0 0
        %489 = vmatpush1.bf16.msra.mxu0 %v467
        %490 = vmatprep.subr.bf16.mxu0 0
        %491 = vmatpush1.bf16.msra.mxu0 %v468
        %492 = vmatprep.subr.bf16.mxu0 0
        %493 = vmatpush1.bf16.msra.mxu0 %v469
        %494 = vmatprep.subr.bf16.mxu0 0
        %495 = vmatpush1.bf16.msra.mxu0 0
        %496 = vmatprep.subr.bf16.mxu0 0
        %497 = vmatpush1.bf16.msra.mxu0 0
        %498 = vmatprep.subr.bf16.mxu0 0
        %499 = vmatpush1.bf16.msra.mxu0 0
        %500 = vmatprep.subr.bf16.mxu0 0
        %501 = vmatpush1.bf16.msra.mxu0 0
        %502 = vmatprep.subr.bf16.mxu0 0
        %503 = vmatpush1.bf16.msra.mxu0 0
        %504 = vmatprep.subr.bf16.mxu0 0
        %505 = vmatpush1.bf16.msra.mxu0 0
        %506 = vmatprep.subr.bf16.mxu0 0
        %507 = vmatpush1.bf16.msra.mxu0 0
        %508 = vmatprep.subr.bf16.mxu0 0
        %509 = vmatpush1.bf16.msra.mxu0 0
        %510 = vmatprep.mubr.bf16.mxu0 0
        %511 = vmatmul.mubr.bf16.gmra.mrb[0].mxu0 %v413
        %v512 = vpop.f32.mrb[0].mxu0
        %v513 = vadd.f32 0.0, %v512
        %v514 = vpop.f32.mrb[0].mxu0
        %v515 = vpop.f32.mrb[0].mxu0
        %v516 = vpop.f32.mrb[0].mxu0
        %517 = vdwg.mxu0
        %v518 = vadd.f32 %v412, %v513
        %519 = vst [vmem:[#allocation2] sm:$0xff] %v518
        // Predicated region
        $region57: #{tpu_custom_call.1} parent=39 // pred_check
          %p520 = pneg %p338
        $region58: #{tpu_custom_call.1} parent=39 // pred_check_branch
          %522 = sbr.rel (%p520) target = $region60
        $region59: #{tpu_custom_call.1} parent=39 // pred_region
          %v523 = vld [vmem:[#allocation2] sm:$0xff]
          %v524 = vld [vmem:[%s336] sm:$0x1]
          %v526 = vlaneseq
          %v527 = vshrl.u32 %v526, 7
          %v528 = vsub.s32 0, %v527
          %v529 = vrot.slane %v524, %v528
          %v531 = vadd.f32 %v523, %v529
          %532 = vst [vmem:[%s329] sm:$0xff] %v531
        $region60: #{tpu_custom_call.1} parent=39 // pred_fallthru
          _
        %s533 = sand.u32 %s184, 1
        %s534 = scalar_lea.sflag [#allocation5], %s533
        %s535 = sand.u32 %s184, 1
        %s536 = smul.addr %s535, 8
        %s537 = scalar_lea.vmem [#allocation9], %s536
        // Predicated region
        $region61: #{tpu_custom_call.1} parent=39 // pred_check
          %p538 = pneg %p194
        $region62: #{tpu_custom_call.1} parent=39 // pred_check_branch
          %540 = sbr.rel (%p538) target = $region64
        $region63: #{tpu_custom_call.1} parent=39 // pred_region
          %s542 = ssub.s32 128, 128
          %543 = vsyncadd %s534, %s542
          %s544 = sadd.s32 %s29, %s28
          %s545 = smul.addr %s544, 128
          %s546 = scalar_lea.hbm %s5, %s545
          %s548 = sshll.u32 %s537, 4
          %s549 = int_to_ptr.vmem [resolvable:$true] %s548
          %551 = dma.vmem_to_hbm [thread:$0]  %s549, 128, %s546, %s534
        $region64: #{tpu_custom_call.1} parent=39 // pred_fallthru
          _
      $region40: #{tpu_custom_call.1} parent=5 // pred_fallthru
        _
      %p552 = scmp.le.s32.totalorder 2, %s18
      // Predicated region
      $region65: #{tpu_custom_call.1} parent=5 // pred_check
        %p553 = pneg %p552
      $region66: #{tpu_custom_call.1} parent=5 // pred_check_branch
        %555 = sbr.rel (%p553) target = $region68
      $region67: #{tpu_custom_call.1} parent=5 // pred_region
        %s556 = ssub.s32 %s18, 2
        // Predicated region
        $region69: #{tpu_custom_call.1} parent=67 // pred_check
          %p557 = pneg %p200
        $region70: #{tpu_custom_call.1} parent=67 // pred_check_branch
          %559 = sbr.rel (%p557) target = $region72
        $region71: #{tpu_custom_call.1} parent=67 // pred_region
          %s560 = sand.u32 %s185, 1
          %s561 = scalar_lea.sflag [#allocation5], %s560
          %s562 = sand.u32 %s185, 1
          %s563 = smul.addr %s562, 8
          %s564 = scalar_lea.vmem [#allocation9], %s563
          %565 = dma.done %s561, 128
        $region72: #{tpu_custom_call.1} parent=67 // pred_fallthru
          _
      $region68: #{tpu_custom_call.1} parent=5 // pred_fallthru
        _
    $region6: #{tpu_custom_call.1} parent=1 // loop_footer
      %s22 = sadd.s32 1, %s18
    $region7: #{tpu_custom_call.1} parent=1 // loop_footer_branch
      %17 = sbr.rel target = $region3
    $region8: #{tpu_custom_call.1} parent=1 // loop_exit
      _
    %566 = vsyncpa [#allocation4], 1
    %s567 = scalar_lea.sflag [#allocation4], 1
    %568 = vsyncpa %s567, 1
    %569 = vsyncpa [#allocation7], 1
    %570 = vsyncpa [#allocation5], 1
    %s571 = scalar_lea.sflag [#allocation5], 1
    %572 = vsyncpa %s571, 1

</llo_original>
